<compile_context>
chip_gen: v5e
topology: v5e:2x2
jax: 0.10.0
libtpu: 0.0.40
codegen_flags: <defaults>
</compile_context>

<pallas_src>
import functools

import jax
import jax.numpy as jnp
from jax.experimental import pallas as pl
from jax.experimental.pallas import tpu as pltpu


def _round_up(x, m):
    return (x + m - 1) // m * m


def _cdiv(a, b):
    return (a + b - 1) // b


def _vmem_capacity_bytes():
    """Physical per-core VMEM (128 MiB v5e/v6e, 64 MiB per TC on v7x)."""
    try:
        info = pltpu.get_tpu_info()
        cap = getattr(info, "vmem_capacity_bytes", None)
        if cap:
            return int(cap)
    except Exception:
        pass
    return 64 * 1024 * 1024  # conservative fallback (v7x)


def ffn_kernel(x_ref, w1_ref, b1_ref, w2_ref, b2_ref, gamma_ref, beta_ref,
               o_ref, acc_ref, *, d_in_valid, d_in_pad, eps, compute_dtype):
    k = pl.program_id(1)

    @pl.when(k == 0)
    def _init():
        acc_ref[...] = jnp.zeros_like(acc_ref)

    # ---- w_1 chunk + ReLU --------------------------------------------------
    # Both MXU operands in compute_dtype (bf16 by default); f32 accumulation.
    x_c = x_ref[...].astype(compute_dtype)
    h = jnp.dot(x_c, w1_ref[...], preferred_element_type=jnp.float32)
    h = h + b1_ref[...].astype(jnp.float32)
    # Downcast before the ReLU (commutes with the downcast): halves the
    # (row_tile, hid_chunk) intermediate and feeds the second MXU pass directly.
    h = jnp.maximum(h.astype(compute_dtype), 0.0)

    # ---- w_2 chunk, accumulated into the f32 VMEM scratch -------------------
    acc_ref[...] += jnp.dot(h, w2_ref[...], preferred_element_type=jnp.float32)

    @pl.when(k == pl.num_programs(1) - 1)
    def _finalize():
        # dropout(p=0.0) is identity; bias + residual in f32.
        y = (acc_ref[...]
             + b2_ref[...].astype(jnp.float32)
             + x_ref[...].astype(jnp.float32))

        inv_n = 1.0 / d_in_valid
        if d_in_valid == d_in_pad:
            # Fast path: no padded lanes, plain LayerNorm (no iota/where).
            mean = jnp.sum(y, axis=-1, keepdims=True) * inv_n
            centered = y - mean
            var = jnp.sum(centered * centered, axis=-1, keepdims=True) * inv_n
        else:
            # Padded lanes are exactly zero; masked reductions == unpadded math.
            col = jax.lax.broadcasted_iota(jnp.int32, y.shape, 1)
            valid = col < d_in_valid
            mean = jnp.sum(jnp.where(valid, y, 0.0), axis=-1, keepdims=True) * inv_n
            centered = jnp.where(valid, y - mean, 0.0)
            var = jnp.sum(centered * centered, axis=-1, keepdims=True) * inv_n

        y_norm = centered * jax.lax.rsqrt(var + eps)
        out = (y_norm * gamma_ref[...].astype(jnp.float32)
               + beta_ref[...].astype(jnp.float32))
        o_ref[...] = out.astype(o_ref.dtype)


def positionwise_feed_forward(x, w1, b1, w2, b2, gamma, beta, *,
                              row_tile=512, min_hid_chunk=1024, eps=1e-6,
                              compute_dtype=jnp.bfloat16):
    """x: (..., d_in). w1: (d_in, d_hid), w2: (d_hid, d_in)."""
    orig_shape = x.shape
    d_in = orig_shape[-1]
    d_hid = w1.shape[1]

    x2d = x.reshape(-1, d_in)
    rows = x2d.shape[0]

    itemsize_x = jnp.dtype(x.dtype).itemsize
    itemsize_c = jnp.dtype(compute_dtype).itemsize
    vmem_cap = _vmem_capacity_bytes()

    # ---- row tiling: big tiles (amortize overhead, high FLOP/byte vs weight
    # traffic), clamped to the actual row count, and split so the "parallel"
    # row axis keeps >= 2 tiles when possible (v7x megacore). -----------------
    row_tile = _round_up(max(row_tile, 128), 128)
    rows_128 = _round_up(rows, 128)
    row_tile = min(row_tile, rows_128)
    if rows_128 // row_tile < 2 and rows_128 >= 256:
        row_tile = _round_up(rows_128 // 2, 128)
    rows_pad = _round_up(rows, row_tile)

    # ---- feature padding (lane-dense, 256-deep-MXU friendly) ----------------
    d_in_pad = _round_up(d_in, 128)
    d_hid_pad_full = _round_up(d_hid, 256)

    # ---- d_hid chunking: weights VMEM-resident when they fit; otherwise
    # stream in >=min_hid_chunk chunks. ---------------------------------------
    resident_bytes = 2 * d_in_pad * d_hid_pad_full * itemsize_c
    weights_resident = resident_bytes <= (vmem_cap * 3) // 8
    if weights_resident:
        hid_chunk = d_hid_pad_full
        n_k = 1
    else:
        n_k = max(1, _cdiv(d_hid_pad_full, max(min_hid_chunk, 256)))
        hid_chunk = _round_up(_cdiv(d_hid_pad_full, n_k), 256)
    d_hid_pad = hid_chunk * n_k

    def pad2(a, r, c):
        return jnp.pad(a, ((0, r - a.shape[0]), (0, c - a.shape[1])))

    x_p = pad2(x2d, rows_pad, d_in_pad)
    w1_p = pad2(w1.astype(compute_dtype), d_in_pad, d_hid_pad)
    w2_p = pad2(w2.astype(compute_dtype), d_hid_pad, d_in_pad)
    b1_p = pad2(b1.reshape(1, -1), 1, d_hid_pad)
    b2_p = pad2(b2.reshape(1, -1), 1, d_in_pad)
    gamma_p = pad2(gamma.reshape(1, -1), 1, d_in_pad)
    beta_p = pad2(beta.reshape(1, -1), 1, d_in_pad)

    grid = (rows_pad // row_tile, n_k)

    # Advisory cost estimate: weights are re-streamed once per row tile when
    # the d_hid axis is chunked, exactly once when resident.
    weight_passes = 1 if n_k == 1 else grid[0]
    cost = pl.CostEstimate(
        flops=int(4 * rows_pad * d_in_pad * d_hid_pad),        # two matmuls
        transcendentals=int(rows_pad),                         # one rsqrt per row
        bytes_accessed=int((x_p.size + rows_pad * d_in_pad) * itemsize_x
                           + (w1_p.size + w2_p.size) * itemsize_c * weight_passes),
    )

    # Explicit VMEM budget (double-buffered blocks + scratch + headroom),
    # derived from the actual per-core VMEM capacity.
    vmem_need = (
        2 * 2 * row_tile * d_in_pad * itemsize_x               # x / out tiles (x2 buf)
        + 2 * 2 * d_in_pad * hid_chunk * itemsize_c            # w1 / w2 chunks (x2 buf)
        + 2 * (hid_chunk + 3 * d_in_pad) * 4                   # b1 / b2 / gamma / beta
        + row_tile * d_in_pad * 4                              # f32 accumulator scratch
        + row_tile * hid_chunk * (4 + itemsize_c)              # h intermediate (f32 + cast)
    )
    vmem_limit = int(min(max(int(vmem_need * 1.25), 32 * 1024 * 1024),
                         (vmem_cap * 7) // 8))

    kernel = functools.partial(ffn_kernel, d_in_valid=d_in, d_in_pad=d_in_pad,
                               eps=eps, compute_dtype=compute_dtype)

    # TODO(synk): if profiling shows exposed weight DMA in the chunked path,
    # add pipeline_mode=pl.Buffered(3) on the w1/w2 BlockSpecs.
    out2d = pl.pallas_call(
        kernel,
        out_shape=jax.ShapeDtypeStruct((rows_pad, d_in_pad), x.dtype),
        grid_spec=pltpu.PrefetchScalarGridSpec(
            num_scalar_prefetch=0,
            grid=grid,
            in_specs=[
                pl.BlockSpec((row_tile, d_in_pad), lambda i, k: (i, 0)),   # x tile
                pl.BlockSpec((d_in_pad, hid_chunk), lambda i, k: (0, k)),  # w1 chunk
                pl.BlockSpec((1, hid_chunk), lambda i, k: (0, k)),         # b1 chunk
                pl.BlockSpec((hid_chunk, d_in_pad), lambda i, k: (k, 0)),  # w2 chunk
                pl.BlockSpec((1, d_in_pad), lambda i, k: (0, 0)),          # b2
                pl.BlockSpec((1, d_in_pad), lambda i, k: (0, 0)),          # gamma
                pl.BlockSpec((1, d_in_pad), lambda i, k: (0, 0)),          # beta
            ],
            out_specs=pl.BlockSpec((row_tile, d_in_pad), lambda i, k: (i, 0)),
            scratch_shapes=[pltpu.VMEM((row_tile, d_in_pad), jnp.float32)],
        ),
        compiler_params=pltpu.CompilerParams(
            dimension_semantics=("parallel", "arbitrary"),
            vmem_limit_bytes=vmem_limit,
        ),
        cost_estimate=cost,
    )(x_p, w1_p, b1_p, w2_p, b2_p, gamma_p, beta_p)

    return out2d[:rows, :d_in].reshape(orig_shape)


def reference_ffn_mixed(x, w1, b1, w2, b2, gamma, beta, *,
                        eps=1e-6, compute_dtype=jnp.bfloat16):
    """Pure-JAX reference with the same mixed-precision recipe as the kernel."""
    xc = x.astype(compute_dtype)
    h = jnp.dot(xc, w1.astype(compute_dtype),
                preferred_element_type=jnp.float32) + b1.astype(jnp.float32)
    h = jnp.maximum(h.astype(compute_dtype), 0.0)
    y = jnp.dot(h, w2.astype(compute_dtype),
                preferred_element_type=jnp.float32) + b2.astype(jnp.float32)
    y = y + x.astype(jnp.float32)
    mean = jnp.mean(y, axis=-1, keepdims=True)
    var = jnp.mean((y - mean) ** 2, axis=-1, keepdims=True)
    out = (y - mean) * jax.lax.rsqrt(var + eps) * gamma + beta
    return out.astype(x.dtype)


if __name__ == "__main__":
    key = jax.random.PRNGKey(0)
    # Small but lane-dense demo shapes (d_in multiple of 128, d_hid of 256).
    batch, seq, d_in, d_hid = 2, 8, 128, 256

    k_x, k_w1, k_b1, k_w2, k_b2 = jax.random.split(key, 5)
    x = jax.random.normal(k_x, (batch, seq, d_in), dtype=jnp.float32)

    # nn.Linear(d_in, d_hid).weight is (d_hid, d_in); we store the transpose.
    w1 = jax.random.normal(k_w1, (d_in, d_hid), dtype=jnp.float32) * 0.05
    b1 = jax.random.normal(k_b1, (d_hid,), dtype=jnp.float32) * 0.05
    w2 = jax.random.normal(k_w2, (d_hid, d_in), dtype=jnp.float32) * 0.05
    b2 = jax.random.normal(k_b2, (d_in,), dtype=jnp.float32) * 0.05
    gamma = jnp.ones((d_in,), dtype=jnp.float32)   # LayerNorm weight init
    beta = jnp.zeros((d_in,), dtype=jnp.float32)   # LayerNorm bias init

    out = positionwise_feed_forward(x, w1, b1, w2, b2, gamma, beta)
    out = jax.block_until_ready(out)
    assert out.shape == x.shape

    # Compare against a pure-JAX reference using the identical mixed-precision
    # recipe (bf16 MXU operands, f32 accumulation / residual / LayerNorm).
    ref = reference_ffn_mixed(x, w1, b1, w2, b2, gamma, beta)
    assert jnp.allclose(out, ref, atol=5e-3, rtol=5e-3), "mismatch vs reference"

    print("KERNEL_OK")
</pallas_src>

<mosaic_0001>
module attributes {stable_mosaic.version = 11 : i64} {
  func.func @ffn_kernel(%arg0: i32, %arg1: i32, %arg2: memref<128x128xf32, #tpu.memory_space<vmem>>, %arg3: memref<128x256xbf16, #tpu.memory_space<vmem>>, %arg4: memref<1x256xf32, #tpu.memory_space<vmem>>, %arg5: memref<256x128xbf16, #tpu.memory_space<vmem>>, %arg6: memref<1x128xf32, #tpu.memory_space<vmem>>, %arg7: memref<1x128xf32, #tpu.memory_space<vmem>>, %arg8: memref<1x128xf32, #tpu.memory_space<vmem>>, %arg9: memref<128x128xf32, #tpu.memory_space<vmem>>, %arg10: memref<128x128xf32, #tpu.memory_space<vmem>>) attributes {dimension_semantics = [#tpu.dimension_semantics<parallel>, #tpu.dimension_semantics<arbitrary>], iteration_bounds = array<i64: 1, 1>, scalar_prefetch = 0 : i64, scratch_operands = 1 : i64, tpu.core_type = #tpu.core_type<tc>, window_params = [{transform_indices = @transform_0, window_bounds = array<i64: 128, 128>}, {transform_indices = @transform_1, window_bounds = array<i64: 128, 256>}, {transform_indices = @transform_2, window_bounds = array<i64: 1, 256>}, {transform_indices = @transform_3, window_bounds = array<i64: 256, 128>}, {pipeline_mode = #tpu.pipeline_mode<synchronous>, transform_indices = @transform_4, window_bounds = array<i64: 1, 128>}, {pipeline_mode = #tpu.pipeline_mode<synchronous>, transform_indices = @transform_5, window_bounds = array<i64: 1, 128>}, {pipeline_mode = #tpu.pipeline_mode<synchronous>, transform_indices = @transform_6, window_bounds = array<i64: 1, 128>}, {transform_indices = @transform_7, window_bounds = array<i64: 128, 128>}]} {
    %c0_i32 = arith.constant 0 : i32
    %0 = arith.cmpi eq, %arg1, %c0_i32 : i32
    %1 = arith.extui %0 : i1 to i32
    %c0_i32_0 = arith.constant 0 : i32
    %2 = arith.cmpi ne, %1, %c0_i32_0 : i32
    scf.if %2 {
      %cst_16 = arith.constant 0.000000e+00 : f32
      %21 = vector.broadcast %cst_16 : f32 to vector<128x128xf32>
      %c0_17 = arith.constant 0 : index
      %c0_18 = arith.constant 0 : index
      %22 = vector.load %arg10[%c0_17, %c0_18] : memref<128x128xf32, #tpu.memory_space<vmem>>, vector<128x128xf32>
      tpu.vector_store %arg10[%c0_17, %c0_18], %21 {strides = array<i32>} : memref<128x128xf32, #tpu.memory_space<vmem>>, vector<128x128xf32>,
    } else {
    }
    %c0 = arith.constant 0 : index
    %c0_1 = arith.constant 0 : index
    %3 = vector.load %arg2[%c0, %c0_1] : memref<128x128xf32, #tpu.memory_space<vmem>>, vector<128x128xf32>
    %4 = arith.truncf %3 : vector<128x128xf32> to vector<128x128xbf16>
    %c0_2 = arith.constant 0 : index
    %c0_3 = arith.constant 0 : index
    %5 = vector.load %arg3[%c0_2, %c0_3] : memref<128x256xbf16, #tpu.memory_space<vmem>>, vector<128x256xbf16>
    %cst = arith.constant dense<0.000000e+00> : vector<128x256xf32>
    %6 = tpu.matmul %4, %5, %cst {dimension_numbers = #tpu.dot_dimension_numbers<[1], [0], [0], [1], [0, 0, 1, 1], [], []>} : vector<128x128xbf16>, vector<128x256xbf16>, vector<128x256xf32> -> vector<128x256xf32>
    %c0_4 = arith.constant 0 : index
    %c0_5 = arith.constant 0 : index
    %7 = vector.load %arg4[%c0_4, %c0_5] : memref<1x256xf32, #tpu.memory_space<vmem>>, vector<1x256xf32>
    %8 = vector.broadcast %7 : vector<1x256xf32> to vector<128x256xf32>
    %9 = arith.addf %6, %8 : vector<128x256xf32>
    %10 = arith.truncf %9 : vector<128x256xf32> to vector<128x256xbf16>
    %cst_6 = arith.constant 0.000000e+00 : bf16
    %11 = vector.broadcast %cst_6 : bf16 to vector<128x256xbf16>
    %12 = arith.maximumf %10, %11 : vector<128x256xbf16>
    %c0_7 = arith.constant 0 : index
    %c0_8 = arith.constant 0 : index
    %13 = vector.load %arg10[%c0_7, %c0_8] : memref<128x128xf32, #tpu.memory_space<vmem>>, vector<128x128xf32>
    %c0_9 = arith.constant 0 : index
    %c0_10 = arith.constant 0 : index
    %14 = vector.load %arg5[%c0_9, %c0_10] : memref<256x128xbf16, #tpu.memory_space<vmem>>, vector<256x128xbf16>
    %cst_11 = arith.constant dense<0.000000e+00> : vector<128x128xf32>
    %15 = tpu.matmul %12, %14, %cst_11 {dimension_numbers = #tpu.dot_dimension_numbers<[1], [0], [0], [1], [0, 0, 1, 1], [], []>} : vector<128x256xbf16>, vector<256x128xbf16>, vector<128x128xf32> -> vector<128x128xf32>
    %16 = arith.addf %13, %15 : vector<128x128xf32>
    %c0_12 = arith.constant 0 : index
    %c0_13 = arith.constant 0 : index
    %17 = vector.load %arg10[%c0_12, %c0_13] : memref<128x128xf32, #tpu.memory_space<vmem>>, vector<128x128xf32>
    tpu.vector_store %arg10[%c0_12, %c0_13], %16 {strides = array<i32>} : memref<128x128xf32, #tpu.memory_space<vmem>>, vector<128x128xf32>,
    %c0_i32_14 = arith.constant 0 : i32
    %18 = arith.cmpi eq, %arg1, %c0_i32_14 : i32
    %19 = arith.extui %18 : i1 to i32
    %c0_i32_15 = arith.constant 0 : i32
    %20 = arith.cmpi ne, %19, %c0_i32_15 : i32
    scf.if %20 {
      %c0_16 = arith.constant 0 : index
      %c0_17 = arith.constant 0 : index
      %21 = vector.load %arg10[%c0_16, %c0_17] : memref<128x128xf32, #tpu.memory_space<vmem>>, vector<128x128xf32>
      %c0_18 = arith.constant 0 : index
      %c0_19 = arith.constant 0 : index
      %22 = vector.load %arg6[%c0_18, %c0_19] : memref<1x128xf32, #tpu.memory_space<vmem>>, vector<1x128xf32>
      %23 = vector.broadcast %22 : vector<1x128xf32> to vector<128x128xf32>
      %24 = arith.addf %21, %23 : vector<128x128xf32>
      %c0_20 = arith.constant 0 : index
      %c0_21 = arith.constant 0 : index
      %25 = vector.load %arg2[%c0_20, %c0_21] : memref<128x128xf32, #tpu.memory_space<vmem>>, vector<128x128xf32>
      %26 = arith.addf %24, %25 : vector<128x128xf32>
      %cst_22 = arith.constant dense<0.000000e+00> : vector<128xf32>
      %27 = vector.multi_reduction <add>, %26, %cst_22 [1] : vector<128x128xf32> to vector<128xf32>
      %28 = vector.shape_cast %27 : vector<128xf32> to vector<128x1xf32>
      %cst_23 = arith.constant 7.812500e-03 : f32
      %29 = vector.broadcast %cst_23 : f32 to vector<128x1xf32>
      %30 = arith.mulf %28, %29 : vector<128x1xf32>
      %31 = vector.broadcast %30 : vector<128x1xf32> to vector<128x128xf32>
      %32 = arith.subf %26, %31 : vector<128x128xf32>
      %33 = arith.mulf %32, %32 : vector<128x128xf32>
      %cst_24 = arith.constant dense<0.000000e+00> : vector<128xf32>
      %34 = vector.multi_reduction <add>, %33, %cst_24 [1] : vector<128x128xf32> to vector<128xf32>
      %35 = vector.shape_cast %34 : vector<128xf32> to vector<128x1xf32>
      %cst_25 = arith.constant 7.812500e-03 : f32
      %36 = vector.broadcast %cst_25 : f32 to vector<128x1xf32>
      %37 = arith.mulf %35, %36 : vector<128x1xf32>
      %cst_26 = arith.constant 9.99999997E-7 : f32
      %38 = vector.broadcast %cst_26 : f32 to vector<128x1xf32>
      %39 = arith.addf %37, %38 : vector<128x1xf32>
      %40 = math.rsqrt %39 : vector<128x1xf32>
      %41 = vector.broadcast %40 : vector<128x1xf32> to vector<128x128xf32>
      %42 = arith.mulf %32, %41 : vector<128x128xf32>
      %c0_27 = arith.constant 0 : index
      %c0_28 = arith.constant 0 : index
      %43 = vector.load %arg7[%c0_27, %c0_28] : memref<1x128xf32, #tpu.memory_space<vmem>>, vector<1x128xf32>
      %44 = vector.broadcast %43 : vector<1x128xf32> to vector<128x128xf32>
      %45 = arith.mulf %42, %44 : vector<128x128xf32>
      %c0_29 = arith.constant 0 : index
      %c0_30 = arith.constant 0 : index
      %46 = vector.load %arg8[%c0_29, %c0_30] : memref<1x128xf32, #tpu.memory_space<vmem>>, vector<1x128xf32>
      %47 = vector.broadcast %46 : vector<1x128xf32> to vector<128x128xf32>
      %48 = arith.addf %45, %47 : vector<128x128xf32>
      %c0_31 = arith.constant 0 : index
      %c0_32 = arith.constant 0 : index
      %49 = vector.load %arg9[%c0_31, %c0_32] : memref<128x128xf32, #tpu.memory_space<vmem>>, vector<128x128xf32>
      tpu.vector_store %arg9[%c0_31, %c0_32], %48 {strides = array<i32>} : memref<128x128xf32, #tpu.memory_space<vmem>>, vector<128x128xf32>,
    } else {
    }
    return
  }
  func.func @transform_0(%arg0: i32, %arg1: i32) -> (i32, i32) {
    %c0_i32 = arith.constant 0 : i32
    %c0_i32_0 = arith.constant 0 : i32
    return %arg0, %c0_i32 : i32, i32
  }
  func.func @transform_1(%arg0: i32, %arg1: i32) -> (i32, i32) {
    %c0_i32 = arith.constant 0 : i32
    %c0_i32_0 = arith.constant 0 : i32
    return %c0_i32, %arg1 : i32, i32
  }
  func.func @transform_2(%arg0: i32, %arg1: i32) -> (i32, i32) {
    %c0_i32 = arith.constant 0 : i32
    %c0_i32_0 = arith.constant 0 : i32
    return %c0_i32, %arg1 : i32, i32
  }
  func.func @transform_3(%arg0: i32, %arg1: i32) -> (i32, i32) {
    %c0_i32 = arith.constant 0 : i32
    %c0_i32_0 = arith.constant 0 : i32
    return %arg1, %c0_i32 : i32, i32
  }
  func.func @transform_4(%arg0: i32, %arg1: i32) -> (i32, i32) {
    %c0_i32 = arith.constant 0 : i32
    %c0_i32_0 = arith.constant 0 : i32
    %c0_i32_1 = arith.constant 0 : i32
    return %c0_i32, %c0_i32_0 : i32, i32
  }
  func.func @transform_5(%arg0: i32, %arg1: i32) -> (i32, i32) {
    %c0_i32 = arith.constant 0 : i32
    %c0_i32_0 = arith.constant 0 : i32
    %c0_i32_1 = arith.constant 0 : i32
    return %c0_i32, %c0_i32_0 : i32, i32
  }
  func.func @transform_6(%arg0: i32, %arg1: i32) -> (i32, i32) {
    %c0_i32 = arith.constant 0 : i32
    %c0_i32_0 = arith.constant 0 : i32
    %c0_i32_1 = arith.constant 0 : i32
    return %c0_i32, %c0_i32_0 : i32, i32
  }
  func.func @transform_7(%arg0: i32, %arg1: i32) -> (i32, i32) {
    %c0_i32 = arith.constant 0 : i32
    %c0_i32_0 = arith.constant 0 : i32
    return %arg0, %c0_i32 : i32, i32
  }
}

</mosaic_0001>

<llo_original>
// kernel: tpu_custom_call.1
$region0: #{tpu_custom_call.1}
  #allocation0 [shape = 'u32[]', space=smem, size = 0x4, offset = 0x4, fixed_abs, tag = 'smem constant byte address 0x4 - core index']
  #allocation1 [shape = 'u32[72,128]{1,0:T(1,128)}', space=vmem, size = 0x9000, scoped, tag = 'internal scratch']
  #allocation2 [shape = 'f32[128,128]{1,0:T(8,128)}', space=vmem, size = 0x10000, scoped, tag = 'scratch operand']
  %s0 = inlined_call_operand.hbm [shape: f32[128,128], index: 0, kind: input, shape index: {}]
  %s1 = inlined_call_operand.hbm [shape: bf16[128,256], index: 1, kind: input, shape index: {}]
  %s2 = inlined_call_operand.hbm [shape: f32[1,256], index: 2, kind: input, shape index: {}]
  %s3 = inlined_call_operand.hbm [shape: bf16[256,128], index: 3, kind: input, shape index: {}]
  %s4 = inlined_call_operand.vmem [shape: f32[1,128], index: 4, kind: input, shape index: {}]
  %s5 = inlined_call_operand.vmem [shape: f32[1,128], index: 5, kind: input, shape index: {}]
  %s6 = inlined_call_operand.vmem [shape: f32[1,128], index: 6, kind: input, shape index: {}]
  %s7 = inlined_call_operand.hbm [shape: f32[128,128], index: 7, kind: output, shape index: {}]
  %s8 = sld [smem:[#allocation0]]
  $region62: #{tpu_custom_call.1} parent=0
    _
  %s10 = ssub.s32 1, %s8
  %s11 = scalar_select 0, %s10, %s8
  $region1: #{tpu_custom_call.1} parent=0
    #allocation3 [shape = 'u8[65536]{0}', space=vmem, size = 0x10000, scoped, tag = 'input window, operand 0, single buffered']
    #allocation4 [shape = 's32[1]{0}', space=sflag, size = 0x4, scoped, tag = 'scoped memory for tpu_custom_call.1']
    #allocation5 [shape = 's32[1]{0}', space=sflag, size = 0x4, scoped, tag = 'scoped memory for tpu_custom_call.1']
    #allocation6 [shape = 'u8[65536]{0}', space=vmem, size = 0x10000, scoped, tag = 'input window, operand 1, single buffered']
    #allocation7 [shape = 's32[1]{0}', space=sflag, size = 0x4, scoped, tag = 'scoped memory for tpu_custom_call.1']
    #allocation8 [shape = 'u8[1024]{0}', space=vmem, size = 0x400, scoped, tag = 'input window, operand 2, single buffered']
    #allocation9 [shape = 'u8[65536]{0}', space=vmem, size = 0x10000, scoped, tag = 'input window, operand 3, single buffered']
    #allocation10 [shape = 's32[1]{0}', space=sflag, size = 0x4, scoped, tag = 'scoped memory for tpu_custom_call.1']
    #allocation11 [shape = 'u8[65536]{0}', space=vmem, size = 0x10000, scoped, tag = 'output window, operand 0, single buffered']
    %12 = vsyncpa [#allocation4], 0
    %13 = vsyncpa [#allocation7], 0
    %14 = vsyncpa [#allocation10], 0
    %15 = vsyncpa [#allocation5], 0
    // Predicated region
    $region2: #{tpu_custom_call.1} parent=1 // pred_check
      _
    $region3: #{tpu_custom_call.1} parent=1 // pred_check_branch
      %17 = sbr.rel (0) target = $region5
    $region4: #{tpu_custom_call.1} parent=1 // pred_region
      %19 = vsyncadd [#allocation4], 0
      %s20 = sshll.u32 %s0, 4
      %s21 = int_to_ptr.hbm [resolvable:$true] %s20
      %s22 = sshll.u32 [#allocation3], 4
      %s23 = int_to_ptr.vmem [resolvable:$true] %s22
      %28 = dma.hbm_to_vmem [thread:$0]  %s21, 2048, %s23, [#allocation4], 128, 128, 8
    $region5: #{tpu_custom_call.1} parent=1 // pred_fallthru
      _
    // Predicated region
    $region6: #{tpu_custom_call.1} parent=1 // pred_check
      _
    $region7: #{tpu_custom_call.1} parent=1 // pred_check_branch
      %30 = sbr.rel (0) target = $region9
    $region8: #{tpu_custom_call.1} parent=1 // pred_region
      %32 = vsyncadd [#allocation7], 0
      %s33 = sshll.u32 %s1, 4
      %s34 = int_to_ptr.hbm [resolvable:$true] %s33
      %s35 = sshll.u32 [#allocation6], 4
      %s36 = int_to_ptr.vmem [resolvable:$true] %s35
      %41 = dma.hbm_to_vmem [thread:$0]  %s34, 2048, %s36, [#allocation7], 128, 128, 8
    $region9: #{tpu_custom_call.1} parent=1 // pred_fallthru
      _
    // Predicated region
    $region10: #{tpu_custom_call.1} parent=1 // pred_check
      _
    $region11: #{tpu_custom_call.1} parent=1 // pred_check_branch
      %43 = sbr.rel (0) target = $region13
    $region12: #{tpu_custom_call.1} parent=1 // pred_region
      %45 = vsyncadd [#allocation7], 0
      %s47 = sshll.u32 %s2, 4
      %s48 = int_to_ptr.hbm [resolvable:$true] %s47
      %s49 = sshll.u32 [#allocation8], 4
      %s50 = int_to_ptr.vmem [resolvable:$true] %s49
      %52 = dma.hbm_to_vmem [thread:$0]  %s48, 32, %s50, [#allocation7]
    $region13: #{tpu_custom_call.1} parent=1 // pred_fallthru
      _
    // Predicated region
    $region14: #{tpu_custom_call.1} parent=1 // pred_check
      _
    $region15: #{tpu_custom_call.1} parent=1 // pred_check_branch
      %54 = sbr.rel (0) target = $region17
    $region16: #{tpu_custom_call.1} parent=1 // pred_region
      %56 = vsyncadd [#allocation10], 0
      %s57 = sshll.u32 %s3, 4
      %s58 = int_to_ptr.hbm [resolvable:$true] %s57
      %s59 = sshll.u32 [#allocation9], 4
      %s60 = int_to_ptr.vmem [resolvable:$true] %s59
      %65 = dma.hbm_to_vmem [thread:$0]  %s58, 2048, %s60, [#allocation10], 64, 64, 4
    $region17: #{tpu_custom_call.1} parent=1 // pred_fallthru
      _
    // Predicated region
    $region18: #{tpu_custom_call.1} parent=1 // pred_check
      _
    $region19: #{tpu_custom_call.1} parent=1 // pred_check_branch
      %67 = sbr.rel (0) target = $region21
    $region20: #{tpu_custom_call.1} parent=1 // pred_region
      _
    $region21: #{tpu_custom_call.1} parent=1 // pred_fallthru
      _
    // Predicated region
    $region22: #{tpu_custom_call.1} parent=1 // pred_check
      _
    $region23: #{tpu_custom_call.1} parent=1 // pred_check_branch
      %69 = sbr.rel (0) target = $region25
    $region24: #{tpu_custom_call.1} parent=1 // pred_region
      _
    $region25: #{tpu_custom_call.1} parent=1 // pred_fallthru
      _
    // Predicated region
    $region26: #{tpu_custom_call.1} parent=1 // pred_check
      _
    $region27: #{tpu_custom_call.1} parent=1 // pred_check_branch
      %71 = sbr.rel (0) target = $region29
    $region28: #{tpu_custom_call.1} parent=1 // pred_region
      _
    $region29: #{tpu_custom_call.1} parent=1 // pred_fallthru
      _
    // Predicated region
    $region30: #{tpu_custom_call.1} parent=1 // pred_check
      _
    $region31: #{tpu_custom_call.1} parent=1 // pred_check_branch
      %73 = sbr.rel (0) target = $region33
    $region32: #{tpu_custom_call.1} parent=1 // pred_region
      %75 = dma.done [#allocation4], 2048
    $region33: #{tpu_custom_call.1} parent=1 // pred_fallthru
      _
    // Predicated region
    $region34: #{tpu_custom_call.1} parent=1 // pred_check
      _
    $region35: #{tpu_custom_call.1} parent=1 // pred_check_branch
      %77 = sbr.rel (0) target = $region37
    $region36: #{tpu_custom_call.1} parent=1 // pred_region
      %79 = dma.done [#allocation7], 2048
    $region37: #{tpu_custom_call.1} parent=1 // pred_fallthru
      _
    // Predicated region
    $region38: #{tpu_custom_call.1} parent=1 // pred_check
      _
    $region39: #{tpu_custom_call.1} parent=1 // pred_check_branch
      %81 = sbr.rel (0) target = $region41
    $region40: #{tpu_custom_call.1} parent=1 // pred_region
      %83 = dma.done [#allocation7], 32
    $region41: #{tpu_custom_call.1} parent=1 // pred_fallthru
      _
    // Predicated region
    $region42: #{tpu_custom_call.1} parent=1 // pred_check
      _
    $region43: #{tpu_custom_call.1} parent=1 // pred_check_branch
      %85 = sbr.rel (0) target = $region45
    $region44: #{tpu_custom_call.1} parent=1 // pred_region
      %87 = dma.done [#allocation10], 2048
    $region45: #{tpu_custom_call.1} parent=1 // pred_fallthru
      _
    %p88 = scmp.eq.s32.totalorder 0, 0
    // Predicated region
    $region46: #{tpu_custom_call.1} parent=1 // pred_check
      %p89 = pneg %p88
    $region47: #{tpu_custom_call.1} parent=1 // pred_check_branch
      %91 = sbr.rel (%p89) target = $region49
    $region48: #{tpu_custom_call.1} parent=1 // pred_region
      %92 = vst [vmem:[#allocation2] sm:$0xff] 0.0
      %93 = vst [vmem:[#allocation2 + $0x8] sm:$0xff] 0.0
      %94 = vst [vmem:[#allocation2 + $0x10] sm:$0xff] 0.0
      %95 = vst [vmem:[#allocation2 + $0x18] sm:$0xff] 0.0
      %96 = vst [vmem:[#allocation2 + $0x20] sm:$0xff] 0.0
      %97 = vst [vmem:[#allocation2 + $0x28] sm:$0xff] 0.0
      %98 = vst [vmem:[#allocation2 + $0x30] sm:$0xff] 0.0
      %99 = vst [vmem:[#allocation2 + $0x38] sm:$0xff] 0.0
      %100 = vst [vmem:[#allocation2 + $0x40] sm:$0xff] 0.0
      %101 = vst [vmem:[#allocation2 + $0x48] sm:$0xff] 0.0
      %102 = vst [vmem:[#allocation2 + $0x50] sm:$0xff] 0.0
      %103 = vst [vmem:[#allocation2 + $0x58] sm:$0xff] 0.0
      %104 = vst [vmem:[#allocation2 + $0x60] sm:$0xff] 0.0
      %105 = vst [vmem:[#allocation2 + $0x68] sm:$0xff] 0.0
      %106 = vst [vmem:[#allocation2 + $0x70] sm:$0xff] 0.0
      %107 = vst [vmem:[#allocation2 + $0x78] sm:$0xff] 0.0
    $region49: #{tpu_custom_call.1} parent=1 // pred_fallthru
      _
    %v108 = vld [vmem:[#allocation3] sm:$0xff]
    %v109 = vld [vmem:[#allocation3 + $0x8] sm:$0xff]
    %v110 = vld [vmem:[#allocation3 + $0x10] sm:$0xff]
    %v111 = vld [vmem:[#allocation3 + $0x18] sm:$0xff]
    %v112 = vld [vmem:[#allocation3 + $0x20] sm:$0xff]
    %v113 = vld [vmem:[#allocation3 + $0x28] sm:$0xff]
    %v114 = vld [vmem:[#allocation3 + $0x30] sm:$0xff]
    %v115 = vld [vmem:[#allocation3 + $0x38] sm:$0xff]
    %v116 = vld [vmem:[#allocation3 + $0x40] sm:$0xff]
    %v117 = vld [vmem:[#allocation3 + $0x48] sm:$0xff]
    %v118 = vld [vmem:[#allocation3 + $0x50] sm:$0xff]
    %v119 = vld [vmem:[#allocation3 + $0x58] sm:$0xff]
    %v120 = vld [vmem:[#allocation3 + $0x60] sm:$0xff]
    %v121 = vld [vmem:[#allocation3 + $0x68] sm:$0xff]
    %v122 = vld [vmem:[#allocation3 + $0x70] sm:$0xff]
    %v123 = vld [vmem:[#allocation3 + $0x78] sm:$0xff]
    %v124 = vpack.c.bf16 %v109, %v108
    %v125 = vpack.c.bf16 %v111, %v110
    %v126 = vpack.c.bf16 %v113, %v112
    %v127 = vpack.c.bf16 %v115, %v114
    %v128 = vpack.c.bf16 %v117, %v116
    %v129 = vpack.c.bf16 %v119, %v118
    %v130 = vpack.c.bf16 %v121, %v120
    %v131 = vpack.c.bf16 %v123, %v122
    %v132 = vld [vmem:[#allocation6] sm:$0xff]
    %v133 = vld [vmem:[#allocation6 + $0x8] sm:$0xff]
    %v134 = vld [vmem:[#allocation6 + $0x10] sm:$0xff]
    %v135 = vld [vmem:[#allocation6 + $0x18] sm:$0xff]
    %v136 = vld [vmem:[#allocation6 + $0x20] sm:$0xff]
    %v137 = vld [vmem:[#allocation6 + $0x28] sm:$0xff]
    %v138 = vld [vmem:[#allocation6 + $0x30] sm:$0xff]
    %v139 = vld [vmem:[#allocation6 + $0x38] sm:$0xff]
    %v140 = vld [vmem:[#allocation6 + $0x40] sm:$0xff]
    %v141 = vld [vmem:[#allocation6 + $0x48] sm:$0xff]
    %v142 = vld [vmem:[#allocation6 + $0x50] sm:$0xff]
    %v143 = vld [vmem:[#allocation6 + $0x58] sm:$0xff]
    %v144 = vld [vmem:[#allocation6 + $0x60] sm:$0xff]
    %v145 = vld [vmem:[#allocation6 + $0x68] sm:$0xff]
    %v146 = vld [vmem:[#allocation6 + $0x70] sm:$0xff]
    %v147 = vld [vmem:[#allocation6 + $0x78] sm:$0xff]
    %v148 = vld [vmem:[#allocation8] sm:$0x3]
    %v150 = vperm.slane %v148, 0
    %v151 = vperm.slane %v148, 1
    %v170 = vunpack.c.l.b16 %v132
    %v171 = vunpack.c.h.b16 %v132
    %v172 = vunpack.c.l.b16 %v133
    %v173 = vunpack.c.h.b16 %v133
    %v174 = vunpack.c.l.b16 %v134
    %v175 = vunpack.c.h.b16 %v134
    %v176 = vunpack.c.l.b16 %v135
    %v177 = vunpack.c.h.b16 %v135
    %v178 = vunpack.c.l.b16 %v136
    %v179 = vunpack.c.h.b16 %v136
    %v180 = vunpack.c.l.b16 %v137
    %v181 = vunpack.c.h.b16 %v137
    %v182 = vunpack.c.l.b16 %v138
    %v183 = vunpack.c.h.b16 %v138
    %v184 = vunpack.c.l.b16 %v139
    %v185 = vunpack.c.h.b16 %v139
    %v186 = vunpack.c.l.b16 %v140
    %v187 = vunpack.c.h.b16 %v140
    %v188 = vunpack.c.l.b16 %v141
    %v189 = vunpack.c.h.b16 %v141
    %v190 = vunpack.c.l.b16 %v142
    %v191 = vunpack.c.h.b16 %v142
    %v192 = vunpack.c.l.b16 %v143
    %v193 = vunpack.c.h.b16 %v143
    %v194 = vunpack.c.l.b16 %v144
    %v195 = vunpack.c.h.b16 %v144
    %v196 = vunpack.c.l.b16 %v145
    %v197 = vunpack.c.h.b16 %v145
    %v198 = vunpack.c.l.b16 %v146
    %v199 = vunpack.c.h.b16 %v146
    %v200 = vunpack.c.l.b16 %v147
    %v201 = vunpack.c.h.b16 %v147
    %v202 = vpack.c.b16 %v172, %v170
    %v203 = vpack.c.b16 %v173, %v171
    %v204 = vpack.c.b16 %v176, %v174
    %v205 = vpack.c.b16 %v177, %v175
    %v206 = vpack.c.b16 %v180, %v178
    %v207 = vpack.c.b16 %v181, %v179
    %v208 = vpack.c.b16 %v184, %v182
    %v209 = vpack.c.b16 %v185, %v183
    %v210 = vpack.c.b16 %v188, %v186
    %v211 = vpack.c.b16 %v189, %v187
    %v212 = vpack.c.b16 %v192, %v190
    %v213 = vpack.c.b16 %v193, %v191
    %v214 = vpack.c.b16 %v196, %v194
    %v215 = vpack.c.b16 %v197, %v195
    %v216 = vpack.c.b16 %v200, %v198
    %v217 = vpack.c.b16 %v201, %v199
    %234 = vmatpush.bf16.msra.mxu0 %v216
    %235 = vmatpush.bf16.msra.mxu0 %v214
    %236 = vmatpush.bf16.msra.mxu0 %v212
    %237 = vmatpush.bf16.msra.mxu0 %v210
    %238 = vmatpush.bf16.msra.mxu0 %v208
    %239 = vmatpush.bf16.msra.mxu0 %v206
    %240 = vmatpush.bf16.msra.mxu0 %v204
    %241 = vmatpush.bf16.msra.mxu0 %v202
    %242 = vmatmul.bf16.gmra.mxu0 %v124
    %v243 = vpop.f32.mrf.mxu0
    %v244 = vadd.f32 %v150, %v243
    %v245 = vpop.f32.mrf.mxu0
    %v246 = vadd.f32 %v150, %v245
    %247 = vmatmul.bf16.gmra.mxu0 %v125
    %v248 = vpop.f32.mrf.mxu0
    %v249 = vadd.f32 %v150, %v248
    %v250 = vpop.f32.mrf.mxu0
    %v251 = vadd.f32 %v150, %v250
    %252 = vmatmul.bf16.gmra.mxu0 %v126
    %v253 = vpop.f32.mrf.mxu0
    %v254 = vadd.f32 %v150, %v253
    %v255 = vpop.f32.mrf.mxu0
    %v256 = vadd.f32 %v150, %v255
    %257 = vmatmul.bf16.gmra.mxu0 %v127
    %v258 = vpop.f32.mrf.mxu0
    %v259 = vadd.f32 %v150, %v258
    %v260 = vpop.f32.mrf.mxu0
    %v261 = vadd.f32 %v150, %v260
    %262 = vmatmul.bf16.gmra.mxu0 %v128
    %v263 = vpop.f32.mrf.mxu0
    %v264 = vadd.f32 %v150, %v263
    %v265 = vpop.f32.mrf.mxu0
    %v266 = vadd.f32 %v150, %v265
    %267 = vmatmul.bf16.gmra.mxu0 %v129
    %v268 = vpop.f32.mrf.mxu0
    %v269 = vadd.f32 %v150, %v268
    %v270 = vpop.f32.mrf.mxu0
    %v271 = vadd.f32 %v150, %v270
    %272 = vmatmul.bf16.gmra.mxu0 %v130
    %v273 = vpop.f32.mrf.mxu0
    %v274 = vadd.f32 %v150, %v273
    %v275 = vpop.f32.mrf.mxu0
    %v276 = vadd.f32 %v150, %v275
    %277 = vmatmul.bf16.gmra.mxu0 %v131
    %v278 = vpop.f32.mrf.mxu0
    %v279 = vadd.f32 %v150, %v278
    %v280 = vpop.f32.mrf.mxu0
    %v281 = vadd.f32 %v150, %v280
    %282 = vdwg.mxu0
    %283 = vmatpush.bf16.msra.mxu0 %v217
    %284 = vmatpush.bf16.msra.mxu0 %v215
    %285 = vmatpush.bf16.msra.mxu0 %v213
    %286 = vmatpush.bf16.msra.mxu0 %v211
    %287 = vmatpush.bf16.msra.mxu0 %v209
    %288 = vmatpush.bf16.msra.mxu0 %v207
    %289 = vmatpush.bf16.msra.mxu0 %v205
    %290 = vmatpush.bf16.msra.mxu0 %v203
    %291 = vmatmul.bf16.gmra.mxu0 %v124
    %v292 = vpop.f32.mrf.mxu0
    %v293 = vadd.f32 %v151, %v292
    %v294 = vpop.f32.mrf.mxu0
    %v295 = vadd.f32 %v151, %v294
    %296 = vmatmul.bf16.gmra.mxu0 %v125
    %v297 = vpop.f32.mrf.mxu0
    %v298 = vadd.f32 %v151, %v297
    %v299 = vpop.f32.mrf.mxu0
    %v300 = vadd.f32 %v151, %v299
    %301 = vmatmul.bf16.gmra.mxu0 %v126
    %v302 = vpop.f32.mrf.mxu0
    %v303 = vadd.f32 %v151, %v302
    %v304 = vpop.f32.mrf.mxu0
    %v305 = vadd.f32 %v151, %v304
    %306 = vmatmul.bf16.gmra.mxu0 %v127
    %v307 = vpop.f32.mrf.mxu0
    %v308 = vadd.f32 %v151, %v307
    %v309 = vpop.f32.mrf.mxu0
    %v310 = vadd.f32 %v151, %v309
    %311 = vmatmul.bf16.gmra.mxu0 %v128
    %v312 = vpop.f32.mrf.mxu0
    %v313 = vadd.f32 %v151, %v312
    %v314 = vpop.f32.mrf.mxu0
    %v315 = vadd.f32 %v151, %v314
    %316 = vmatmul.bf16.gmra.mxu0 %v129
    %v317 = vpop.f32.mrf.mxu0
    %v318 = vadd.f32 %v151, %v317
    %v319 = vpop.f32.mrf.mxu0
    %v320 = vadd.f32 %v151, %v319
    %321 = vmatmul.bf16.gmra.mxu0 %v130
    %v322 = vpop.f32.mrf.mxu0
    %v323 = vadd.f32 %v151, %v322
    %v324 = vpop.f32.mrf.mxu0
    %v325 = vadd.f32 %v151, %v324
    %326 = vmatmul.bf16.gmra.mxu0 %v131
    %v327 = vpop.f32.mrf.mxu0
    %v328 = vadd.f32 %v151, %v327
    %v329 = vpop.f32.mrf.mxu0
    %v330 = vadd.f32 %v151, %v329
    %331 = vdwg.mxu0
    %v332 = vpack.c.bf16 %v293, %v244
    %v333 = vpack.c.bf16 %v295, %v246
    %v334 = vpack.c.bf16 %v298, %v249
    %v335 = vpack.c.bf16 %v300, %v251
    %v336 = vpack.c.bf16 %v303, %v254
    %v337 = vpack.c.bf16 %v305, %v256
    %v338 = vpack.c.bf16 %v308, %v259
    %v339 = vpack.c.bf16 %v310, %v261
    %v340 = vpack.c.bf16 %v313, %v264
    %v341 = vpack.c.bf16 %v315, %v266
    %v342 = vpack.c.bf16 %v318, %v269
    %v343 = vpack.c.bf16 %v320, %v271
    %v344 = vpack.c.bf16 %v323, %v274
    %v345 = vpack.c.bf16 %v325, %v276
    %v346 = vpack.c.bf16 %v328, %v279
    %v347 = vpack.c.bf16 %v330, %v281
    %v348 = vunpack.c.l.bf16 %v332
    %v349 = vunpack.c.h.bf16 %v332
    %v350 = vunpack.c.l.bf16 %v333
    %v351 = vunpack.c.h.bf16 %v333
    %v352 = vunpack.c.l.bf16 %v334
    %v353 = vunpack.c.h.bf16 %v334
    %v354 = vunpack.c.l.bf16 %v335
    %v355 = vunpack.c.h.bf16 %v335
    %v356 = vunpack.c.l.bf16 %v336
    %v357 = vunpack.c.h.bf16 %v336
    %v358 = vunpack.c.l.bf16 %v337
    %v359 = vunpack.c.h.bf16 %v337
    %v360 = vunpack.c.l.bf16 %v338
    %v361 = vunpack.c.h.bf16 %v338
    %v362 = vunpack.c.l.bf16 %v339
    %v363 = vunpack.c.h.bf16 %v339
    %v364 = vunpack.c.l.bf16 %v340
    %v365 = vunpack.c.h.bf16 %v340
    %v366 = vunpack.c.l.bf16 %v341
    %v367 = vunpack.c.h.bf16 %v341
    %v368 = vunpack.c.l.bf16 %v342
    %v369 = vunpack.c.h.bf16 %v342
    %v370 = vunpack.c.l.bf16 %v343
    %v371 = vunpack.c.h.bf16 %v343
    %v372 = vunpack.c.l.bf16 %v344
    %v373 = vunpack.c.h.bf16 %v344
    %v374 = vunpack.c.l.bf16 %v345
    %v375 = vunpack.c.h.bf16 %v345
    %v376 = vunpack.c.l.bf16 %v346
    %v377 = vunpack.c.h.bf16 %v346
    %v378 = vunpack.c.l.bf16 %v347
    %v379 = vunpack.c.h.bf16 %v347
    %v380 = vmax.f32 %v348, 0.0
    %v381 = vmax.f32 %v349, 0.0
    %v382 = vmax.f32 %v350, 0.0
    %v383 = vmax.f32 %v351, 0.0
    %v384 = vmax.f32 %v352, 0.0
    %v385 = vmax.f32 %v353, 0.0
    %v386 = vmax.f32 %v354, 0.0
    %v387 = vmax.f32 %v355, 0.0
    %v388 = vmax.f32 %v356, 0.0
    %v389 = vmax.f32 %v357, 0.0
    %v390 = vmax.f32 %v358, 0.0
    %v391 = vmax.f32 %v359, 0.0
    %v392 = vmax.f32 %v360, 0.0
    %v393 = vmax.f32 %v361, 0.0
    %v394 = vmax.f32 %v362, 0.0
    %v395 = vmax.f32 %v363, 0.0
    %v396 = vmax.f32 %v364, 0.0
    %v397 = vmax.f32 %v365, 0.0
    %v398 = vmax.f32 %v366, 0.0
    %v399 = vmax.f32 %v367, 0.0
    %v400 = vmax.f32 %v368, 0.0
    %v401 = vmax.f32 %v369, 0.0
    %v402 = vmax.f32 %v370, 0.0
    %v403 = vmax.f32 %v371, 0.0
    %v404 = vmax.f32 %v372, 0.0
    %v405 = vmax.f32 %v373, 0.0
    %v406 = vmax.f32 %v374, 0.0
    %v407 = vmax.f32 %v375, 0.0
    %v408 = vmax.f32 %v376, 0.0
    %v409 = vmax.f32 %v377, 0.0
    %v410 = vmax.f32 %v378, 0.0
    %v411 = vmax.f32 %v379, 0.0
    %v412 = vpack.c.bf16 %v382, %v380
    %v413 = vpack.c.bf16 %v383, %v381
    %v414 = vpack.c.bf16 %v386, %v384
    %v415 = vpack.c.bf16 %v387, %v385
    %v416 = vpack.c.bf16 %v390, %v388
    %v417 = vpack.c.bf16 %v391, %v389
    %v418 = vpack.c.bf16 %v394, %v392
    %v419 = vpack.c.bf16 %v395, %v393
    %v420 = vpack.c.bf16 %v398, %v396
    %v421 = vpack.c.bf16 %v399, %v397
    %v422 = vpack.c.bf16 %v402, %v400
    %v423 = vpack.c.bf16 %v403, %v401
    %v424 = vpack.c.bf16 %v406, %v404
    %v425 = vpack.c.bf16 %v407, %v405
    %v426 = vpack.c.bf16 %v410, %v408
    %v427 = vpack.c.bf16 %v411, %v409
    %v428 = vld [vmem:[#allocation2] sm:$0xff]
    %v429 = vld [vmem:[#allocation2 + $0x8] sm:$0xff]
    %v430 = vld [vmem:[#allocation2 + $0x10] sm:$0xff]
    %v431 = vld [vmem:[#allocation2 + $0x18] sm:$0xff]
    %v432 = vld [vmem:[#allocation2 + $0x20] sm:$0xff]
    %v433 = vld [vmem:[#allocation2 + $0x28] sm:$0xff]
    %v434 = vld [vmem:[#allocation2 + $0x30] sm:$0xff]
    %v435 = vld [vmem:[#allocation2 + $0x38] sm:$0xff]
    %v436 = vld [vmem:[#allocation2 + $0x40] sm:$0xff]
    %v437 = vld [vmem:[#allocation2 + $0x48] sm:$0xff]
    %v438 = vld [vmem:[#allocation2 + $0x50] sm:$0xff]
    %v439 = vld [vmem:[#allocation2 + $0x58] sm:$0xff]
    %v440 = vld [vmem:[#allocation2 + $0x60] sm:$0xff]
    %v441 = vld [vmem:[#allocation2 + $0x68] sm:$0xff]
    %v442 = vld [vmem:[#allocation2 + $0x70] sm:$0xff]
    %v443 = vld [vmem:[#allocation2 + $0x78] sm:$0xff]
    %v444 = vld [vmem:[#allocation9] sm:$0xf]
    %v445 = vld [vmem:[#allocation9 + $0x4] sm:$0xf]
    %v446 = vld [vmem:[#allocation9 + $0x8] sm:$0xf]
    %v447 = vld [vmem:[#allocation9 + $0xc] sm:$0xf]
    %v448 = vld [vmem:[#allocation9 + $0x10] sm:$0xf]
    %v449 = vld [vmem:[#allocation9 + $0x14] sm:$0xf]
    %v450 = vld [vmem:[#allocation9 + $0x18] sm:$0xf]
    %v451 = vld [vmem:[#allocation9 + $0x1c] sm:$0xf]
    %v452 = vld [vmem:[#allocation9 + $0x20] sm:$0xf]
    %v453 = vld [vmem:[#allocation9 + $0x24] sm:$0xf]
    %v454 = vld [vmem:[#allocation9 + $0x28] sm:$0xf]
    %v455 = vld [vmem:[#allocation9 + $0x2c] sm:$0xf]
    %v456 = vld [vmem:[#allocation9 + $0x30] sm:$0xf]
    %v457 = vld [vmem:[#allocation9 + $0x34] sm:$0xf]
    %v458 = vld [vmem:[#allocation9 + $0x38] sm:$0xf]
    %v459 = vld [vmem:[#allocation9 + $0x3c] sm:$0xf]
    %v460 = vld [vmem:[#allocation9 + $0x40] sm:$0xf]
    %v461 = vld [vmem:[#allocation9 + $0x44] sm:$0xf]
    %v462 = vld [vmem:[#allocation9 + $0x48] sm:$0xf]
    %v463 = vld [vmem:[#allocation9 + $0x4c] sm:$0xf]
    %v464 = vld [vmem:[#allocation9 + $0x50] sm:$0xf]
    %v465 = vld [vmem:[#allocation9 + $0x54] sm:$0xf]
    %v466 = vld [vmem:[#allocation9 + $0x58] sm:$0xf]
    %v467 = vld [vmem:[#allocation9 + $0x5c] sm:$0xf]
    %v468 = vld [vmem:[#allocation9 + $0x60] sm:$0xf]
    %v469 = vld [vmem:[#allocation9 + $0x64] sm:$0xf]
    %v470 = vld [vmem:[#allocation9 + $0x68] sm:$0xf]
    %v471 = vld [vmem:[#allocation9 + $0x6c] sm:$0xf]
    %v472 = vld [vmem:[#allocation9 + $0x70] sm:$0xf]
    %v473 = vld [vmem:[#allocation9 + $0x74] sm:$0xf]
    %v474 = vld [vmem:[#allocation9 + $0x78] sm:$0xf]
    %v475 = vld [vmem:[#allocation9 + $0x7c] sm:$0xf]
    %v508 = vunpack.c.l.b16 %v444
    %v509 = vunpack.c.l.b16 %v445
    %v510 = vunpack.c.l.b16 %v446
    %v511 = vunpack.c.l.b16 %v447
    %v512 = vunpack.c.l.b16 %v448
    %v513 = vunpack.c.l.b16 %v449
    %v514 = vunpack.c.l.b16 %v450
    %v515 = vunpack.c.l.b16 %v451
    %v516 = vunpack.c.l.b16 %v452
    %v517 = vunpack.c.l.b16 %v453
    %v518 = vunpack.c.l.b16 %v454
    %v519 = vunpack.c.l.b16 %v455
    %v520 = vunpack.c.l.b16 %v456
    %v521 = vunpack.c.l.b16 %v457
    %v522 = vunpack.c.l.b16 %v458
    %v523 = vunpack.c.l.b16 %v459
    %v524 = vunpack.c.l.b16 %v460
    %v525 = vunpack.c.l.b16 %v461
    %v526 = vunpack.c.l.b16 %v462
    %v527 = vunpack.c.l.b16 %v463
    %v528 = vunpack.c.l.b16 %v464
    %v529 = vunpack.c.l.b16 %v465
    %v530 = vunpack.c.l.b16 %v466
    %v531 = vunpack.c.l.b16 %v467
    %v532 = vunpack.c.l.b16 %v468
    %v533 = vunpack.c.l.b16 %v469
    %v534 = vunpack.c.l.b16 %v470
    %v535 = vunpack.c.l.b16 %v471
    %v536 = vunpack.c.l.b16 %v472
    %v537 = vunpack.c.l.b16 %v473
    %v538 = vunpack.c.l.b16 %v474
    %v539 = vunpack.c.l.b16 %v475
    %v540 = vpack.c.b16 %v509, %v508
    %v541 = vpack.c.b16 %v511, %v510
    %v542 = vpack.c.b16 %v513, %v512
    %v543 = vpack.c.b16 %v515, %v514
    %v544 = vpack.c.b16 %v517, %v516
    %v545 = vpack.c.b16 %v519, %v518
    %v546 = vpack.c.b16 %v521, %v520
    %v547 = vpack.c.b16 %v523, %v522
    %v548 = vpack.c.b16 %v525, %v524
    %v549 = vpack.c.b16 %v527, %v526
    %v550 = vpack.c.b16 %v529, %v528
    %v551 = vpack.c.b16 %v531, %v530
    %v552 = vpack.c.b16 %v533, %v532
    %v553 = vpack.c.b16 %v535, %v534
    %v554 = vpack.c.b16 %v537, %v536
    %v555 = vpack.c.b16 %v539, %v538
    %572 = vmatpush.bf16.msra.mxu0 %v547
    %573 = vmatpush.bf16.msra.mxu0 %v546
    %574 = vmatpush.bf16.msra.mxu0 %v545
    %575 = vmatpush.bf16.msra.mxu0 %v544
    %576 = vmatpush.bf16.msra.mxu0 %v543
    %577 = vmatpush.bf16.msra.mxu0 %v542
    %578 = vmatpush.bf16.msra.mxu0 %v541
    %579 = vmatpush.bf16.msra.mxu0 %v540
    %580 = vmatmul.bf16.gmra.mxu0 %v412
    %v581 = vpop.f32.mrf.mxu0
    %v582 = vadd.f32 0.0, %v581
    %v583 = vpop.f32.mrf.mxu0
    %v584 = vadd.f32 0.0, %v583
    %585 = vmatmul.bf16.gmra.mxu0 %v414
    %v586 = vpop.f32.mrf.mxu0
    %v587 = vadd.f32 0.0, %v586
    %v588 = vpop.f32.mrf.mxu0
    %v589 = vadd.f32 0.0, %v588
    %590 = vmatmul.bf16.gmra.mxu0 %v416
    %v591 = vpop.f32.mrf.mxu0
    %v592 = vadd.f32 0.0, %v591
    %v593 = vpop.f32.mrf.mxu0
    %v594 = vadd.f32 0.0, %v593
    %595 = vmatmul.bf16.gmra.mxu0 %v418
    %v596 = vpop.f32.mrf.mxu0
    %v597 = vadd.f32 0.0, %v596
    %v598 = vpop.f32.mrf.mxu0
    %v599 = vadd.f32 0.0, %v598
    %600 = vmatmul.bf16.gmra.mxu0 %v420
    %v601 = vpop.f32.mrf.mxu0
    %v602 = vadd.f32 0.0, %v601
    %v603 = vpop.f32.mrf.mxu0
    %v604 = vadd.f32 0.0, %v603
    %605 = vmatmul.bf16.gmra.mxu0 %v422
    %v606 = vpop.f32.mrf.mxu0
    %v607 = vadd.f32 0.0, %v606
    %v608 = vpop.f32.mrf.mxu0
    %v609 = vadd.f32 0.0, %v608
    %610 = vmatmul.bf16.gmra.mxu0 %v424
    %v611 = vpop.f32.mrf.mxu0
    %v612 = vadd.f32 0.0, %v611
    %v613 = vpop.f32.mrf.mxu0
    %v614 = vadd.f32 0.0, %v613
    %615 = vmatmul.bf16.gmra.mxu0 %v426
    %v616 = vpop.f32.mrf.mxu0
    %v617 = vadd.f32 0.0, %v616
    %v618 = vpop.f32.mrf.mxu0
    %v619 = vadd.f32 0.0, %v618
    %620 = vdwg.mxu0
    %621 = vmatpush.bf16.msra.mxu0 %v555
    %622 = vmatpush.bf16.msra.mxu0 %v554
    %623 = vmatpush.bf16.msra.mxu0 %v553
    %624 = vmatpush.bf16.msra.mxu0 %v552
    %625 = vmatpush.bf16.msra.mxu0 %v551
    %626 = vmatpush.bf16.msra.mxu0 %v550
    %627 = vmatpush.bf16.msra.mxu0 %v549
    %628 = vmatpush.bf16.msra.mxu0 %v548
    %629 = vmatmul.bf16.gmra.mxu0 %v413
    %v630 = vpop.f32.mrf.mxu0
    %v631 = vadd.f32 %v582, %v630
    %v632 = vpop.f32.mrf.mxu0
    %v633 = vadd.f32 %v584, %v632
    %634 = vmatmul.bf16.gmra.mxu0 %v415
    %v635 = vpop.f32.mrf.mxu0
    %v636 = vadd.f32 %v587, %v635
    %v637 = vpop.f32.mrf.mxu0
    %v638 = vadd.f32 %v589, %v637
    %639 = vmatmul.bf16.gmra.mxu0 %v417
    %v640 = vpop.f32.mrf.mxu0
    %v641 = vadd.f32 %v592, %v640
    %v642 = vpop.f32.mrf.mxu0
    %v643 = vadd.f32 %v594, %v642
    %644 = vmatmul.bf16.gmra.mxu0 %v419
    %v645 = vpop.f32.mrf.mxu0
    %v646 = vadd.f32 %v597, %v645
    %v647 = vpop.f32.mrf.mxu0
    %v648 = vadd.f32 %v599, %v647
    %649 = vmatmul.bf16.gmra.mxu0 %v421
    %v650 = vpop.f32.mrf.mxu0
    %v651 = vadd.f32 %v602, %v650
    %v652 = vpop.f32.mrf.mxu0
    %v653 = vadd.f32 %v604, %v652
    %654 = vmatmul.bf16.gmra.mxu0 %v423
    %v655 = vpop.f32.mrf.mxu0
    %v656 = vadd.f32 %v607, %v655
    %v657 = vpop.f32.mrf.mxu0
    %v658 = vadd.f32 %v609, %v657
    %659 = vmatmul.bf16.gmra.mxu0 %v425
    %v660 = vpop.f32.mrf.mxu0
    %v661 = vadd.f32 %v612, %v660
    %v662 = vpop.f32.mrf.mxu0
    %v663 = vadd.f32 %v614, %v662
    %664 = vmatmul.bf16.gmra.mxu0 %v427
    %v665 = vpop.f32.mrf.mxu0
    %v666 = vadd.f32 %v617, %v665
    %v667 = vpop.f32.mrf.mxu0
    %v668 = vadd.f32 %v619, %v667
    %669 = vdwg.mxu0
    %v670 = vadd.f32 %v428, %v631
    %v671 = vadd.f32 %v429, %v633
    %v672 = vadd.f32 %v430, %v636
    %v673 = vadd.f32 %v431, %v638
    %v674 = vadd.f32 %v432, %v641
    %v675 = vadd.f32 %v433, %v643
    %v676 = vadd.f32 %v434, %v646
    %v677 = vadd.f32 %v435, %v648
    %v678 = vadd.f32 %v436, %v651
    %v679 = vadd.f32 %v437, %v653
    %v680 = vadd.f32 %v438, %v656
    %v681 = vadd.f32 %v439, %v658
    %v682 = vadd.f32 %v440, %v661
    %v683 = vadd.f32 %v441, %v663
    %v684 = vadd.f32 %v442, %v666
    %v685 = vadd.f32 %v443, %v668
    %686 = vst [vmem:[#allocation2] sm:$0xff] %v670
    %687 = vst [vmem:[#allocation2 + $0x8] sm:$0xff] %v671
    %688 = vst [vmem:[#allocation2 + $0x10] sm:$0xff] %v672
    %689 = vst [vmem:[#allocation2 + $0x18] sm:$0xff] %v673
    %690 = vst [vmem:[#allocation2 + $0x20] sm:$0xff] %v674
    %691 = vst [vmem:[#allocation2 + $0x28] sm:$0xff] %v675
    %692 = vst [vmem:[#allocation2 + $0x30] sm:$0xff] %v676
    %693 = vst [vmem:[#allocation2 + $0x38] sm:$0xff] %v677
    %694 = vst [vmem:[#allocation2 + $0x40] sm:$0xff] %v678
    %695 = vst [vmem:[#allocation2 + $0x48] sm:$0xff] %v679
    %696 = vst [vmem:[#allocation2 + $0x50] sm:$0xff] %v680
    %697 = vst [vmem:[#allocation2 + $0x58] sm:$0xff] %v681
    %698 = vst [vmem:[#allocation2 + $0x60] sm:$0xff] %v682
    %699 = vst [vmem:[#allocation2 + $0x68] sm:$0xff] %v683
    %700 = vst [vmem:[#allocation2 + $0x70] sm:$0xff] %v684
    %701 = vst [vmem:[#allocation2 + $0x78] sm:$0xff] %v685
    // Predicated region
    $region50: #{tpu_custom_call.1} parent=1 // pred_check
      %p702 = pneg %p88
    $region51: #{tpu_custom_call.1} parent=1 // pred_check_branch
      %704 = sbr.rel (%p702) target = $region53
    $region52: #{tpu_custom_call.1} parent=1 // pred_region
      %v705 = vld [vmem:[#allocation2] sm:$0xff]
      %v706 = vld [vmem:[#allocation2 + $0x8] sm:$0xff]
      %v707 = vld [vmem:[#allocation2 + $0x10] sm:$0xff]
      %v708 = vld [vmem:[#allocation2 + $0x18] sm:$0xff]
      %v709 = vld [vmem:[#allocation2 + $0x20] sm:$0xff]
      %v710 = vld [vmem:[#allocation2 + $0x28] sm:$0xff]
      %v711 = vld [vmem:[#allocation2 + $0x30] sm:$0xff]
      %v712 = vld [vmem:[#allocation2 + $0x38] sm:$0xff]
      %v713 = vld [vmem:[#allocation2 + $0x40] sm:$0xff]
      %v714 = vld [vmem:[#allocation2 + $0x48] sm:$0xff]
      %v715 = vld [vmem:[#allocation2 + $0x50] sm:$0xff]
      %v716 = vld [vmem:[#allocation2 + $0x58] sm:$0xff]
      %v717 = vld [vmem:[#allocation2 + $0x60] sm:$0xff]
      %v718 = vld [vmem:[#allocation2 + $0x68] sm:$0xff]
      %v719 = vld [vmem:[#allocation2 + $0x70] sm:$0xff]
      %v720 = vld [vmem:[#allocation2 + $0x78] sm:$0xff]
      %v721 = vld [vmem:[%s4] sm:$0x1]
      %v723 = vperm.slane %v721, 0
      %v725 = vadd.f32 %v705, %v723
      %v726 = vadd.f32 %v706, %v723
      %v727 = vadd.f32 %v707, %v723
      %v728 = vadd.f32 %v708, %v723
      %v729 = vadd.f32 %v709, %v723
      %v730 = vadd.f32 %v710, %v723
      %v731 = vadd.f32 %v711, %v723
      %v732 = vadd.f32 %v712, %v723
      %v733 = vadd.f32 %v713, %v723
      %v734 = vadd.f32 %v714, %v723
      %v735 = vadd.f32 %v715, %v723
      %v736 = vadd.f32 %v716, %v723
      %v737 = vadd.f32 %v717, %v723
      %v738 = vadd.f32 %v718, %v723
      %v739 = vadd.f32 %v719, %v723
      %v740 = vadd.f32 %v720, %v723
      %v741 = vld [vmem:[#allocation3] sm:$0xff]
      %v742 = vld [vmem:[#allocation3 + $0x8] sm:$0xff]
      %v743 = vld [vmem:[#allocation3 + $0x10] sm:$0xff]
      %v744 = vld [vmem:[#allocation3 + $0x18] sm:$0xff]
      %v745 = vld [vmem:[#allocation3 + $0x20] sm:$0xff]
      %v746 = vld [vmem:[#allocation3 + $0x28] sm:$0xff]
      %v747 = vld [vmem:[#allocation3 + $0x30] sm:$0xff]
      %v748 = vld [vmem:[#allocation3 + $0x38] sm:$0xff]
      %v749 = vld [vmem:[#allocation3 + $0x40] sm:$0xff]
      %v750 = vld [vmem:[#allocation3 + $0x48] sm:$0xff]
      %v751 = vld [vmem:[#allocation3 + $0x50] sm:$0xff]
      %v752 = vld [vmem:[#allocation3 + $0x58] sm:$0xff]
      %v753 = vld [vmem:[#allocation3 + $0x60] sm:$0xff]
      %v754 = vld [vmem:[#allocation3 + $0x68] sm:$0xff]
      %v755 = vld [vmem:[#allocation3 + $0x70] sm:$0xff]
      %v756 = vld [vmem:[#allocation3 + $0x78] sm:$0xff]
      %v757 = vadd.f32 %v725, %v741
      %v758 = vadd.f32 %v726, %v742
      %v759 = vadd.f32 %v727, %v743
      %v760 = vadd.f32 %v728, %v744
      %v761 = vadd.f32 %v729, %v745
      %v762 = vadd.f32 %v730, %v746
      %v763 = vadd.f32 %v731, %v747
      %v764 = vadd.f32 %v732, %v748
      %v765 = vadd.f32 %v733, %v749
      %v766 = vadd.f32 %v734, %v750
      %v767 = vadd.f32 %v735, %v751
      %v768 = vadd.f32 %v736, %v752
      %v769 = vadd.f32 %v737, %v753
      %v770 = vadd.f32 %v738, %v754
      %v771 = vadd.f32 %v739, %v755
      %v772 = vadd.f32 %v740, %v756
      %773 = vadd.xlane.f32.xlu0 %v757
      %v774 = vpop.xlane.xlu0 %773
      %775 = vadd.xlane.f32.xlu0 %v758
      %v776 = vpop.xlane.xlu0 %775
      %777 = vadd.xlane.f32.xlu0 %v759
      %v778 = vpop.xlane.xlu0 %777
      %779 = vadd.xlane.f32.xlu0 %v760
      %v780 = vpop.xlane.xlu0 %779
      %781 = vadd.xlane.f32.xlu0 %v761
      %v782 = vpop.xlane.xlu0 %781
      %783 = vadd.xlane.f32.xlu0 %v762
      %v784 = vpop.xlane.xlu0 %783
      %785 = vadd.xlane.f32.xlu0 %v763
      %v786 = vpop.xlane.xlu0 %785
      %787 = vadd.xlane.f32.xlu0 %v764
      %v788 = vpop.xlane.xlu0 %787
      %789 = vadd.xlane.f32.xlu0 %v765
      %v790 = vpop.xlane.xlu0 %789
      %791 = vadd.xlane.f32.xlu0 %v766
      %v792 = vpop.xlane.xlu0 %791
      %793 = vadd.xlane.f32.xlu0 %v767
      %v794 = vpop.xlane.xlu0 %793
      %795 = vadd.xlane.f32.xlu0 %v768
      %v796 = vpop.xlane.xlu0 %795
      %797 = vadd.xlane.f32.xlu0 %v769
      %v798 = vpop.xlane.xlu0 %797
      %799 = vadd.xlane.f32.xlu0 %v770
      %v800 = vpop.xlane.xlu0 %799
      %801 = vadd.xlane.f32.xlu0 %v771
      %v802 = vpop.xlane.xlu0 %801
      %803 = vadd.xlane.f32.xlu0 %v772
      %v804 = vpop.xlane.xlu0 %803
      %v805 = vmul.f32 %v774, 0.0078125
      %v806 = vmul.f32 %v776, 0.0078125
      %v807 = vmul.f32 %v778, 0.0078125
      %v808 = vmul.f32 %v780, 0.0078125
      %v809 = vmul.f32 %v782, 0.0078125
      %v810 = vmul.f32 %v784, 0.0078125
      %v811 = vmul.f32 %v786, 0.0078125
      %v812 = vmul.f32 %v788, 0.0078125
      %v813 = vmul.f32 %v790, 0.0078125
      %v814 = vmul.f32 %v792, 0.0078125
      %v815 = vmul.f32 %v794, 0.0078125
      %v816 = vmul.f32 %v796, 0.0078125
      %v817 = vmul.f32 %v798, 0.0078125
      %v818 = vmul.f32 %v800, 0.0078125
      %v819 = vmul.f32 %v802, 0.0078125
      %v820 = vmul.f32 %v804, 0.0078125
      %v821 = vsub.f32 %v757, %v805
      %v822 = vsub.f32 %v758, %v806
      %v823 = vsub.f32 %v759, %v807
      %v824 = vsub.f32 %v760, %v808
      %v825 = vsub.f32 %v761, %v809
      %v826 = vsub.f32 %v762, %v810
      %v827 = vsub.f32 %v763, %v811
      %v828 = vsub.f32 %v764, %v812
      %v829 = vsub.f32 %v765, %v813
      %v830 = vsub.f32 %v766, %v814
      %v831 = vsub.f32 %v767, %v815
      %v832 = vsub.f32 %v768, %v816
      %v833 = vsub.f32 %v769, %v817
      %v834 = vsub.f32 %v770, %v818
      %v835 = vsub.f32 %v771, %v819
      %v836 = vsub.f32 %v772, %v820
      %v837 = vmul.f32 %v821, %v821
      %v838 = vmul.f32 %v822, %v822
      %v839 = vmul.f32 %v823, %v823
      %v840 = vmul.f32 %v824, %v824
      %v841 = vmul.f32 %v825, %v825
      %v842 = vmul.f32 %v826, %v826
      %v843 = vmul.f32 %v827, %v827
      %v844 = vmul.f32 %v828, %v828
      %v845 = vmul.f32 %v829, %v829
      %v846 = vmul.f32 %v830, %v830
      %v847 = vmul.f32 %v831, %v831
      %v848 = vmul.f32 %v832, %v832
      %v849 = vmul.f32 %v833, %v833
      %v850 = vmul.f32 %v834, %v834
      %v851 = vmul.f32 %v835, %v835
      %v852 = vmul.f32 %v836, %v836
      %853 = vadd.xlane.f32.xlu0 %v837
      %v854 = vpop.xlane.xlu0 %853
      %855 = vadd.xlane.f32.xlu0 %v838
      %v856 = vpop.xlane.xlu0 %855
      %857 = vadd.xlane.f32.xlu0 %v839
      %v858 = vpop.xlane.xlu0 %857
      %859 = vadd.xlane.f32.xlu0 %v840
      %v860 = vpop.xlane.xlu0 %859
      %861 = vadd.xlane.f32.xlu0 %v841
      %v862 = vpop.xlane.xlu0 %861
      %863 = vadd.xlane.f32.xlu0 %v842
      %v864 = vpop.xlane.xlu0 %863
      %865 = vadd.xlane.f32.xlu0 %v843
      %v866 = vpop.xlane.xlu0 %865
      %867 = vadd.xlane.f32.xlu0 %v844
      %v868 = vpop.xlane.xlu0 %867
      %869 = vadd.xlane.f32.xlu0 %v845
      %v870 = vpop.xlane.xlu0 %869
      %871 = vadd.xlane.f32.xlu0 %v846
      %v872 = vpop.xlane.xlu0 %871
      %873 = vadd.xlane.f32.xlu0 %v847
      %v874 = vpop.xlane.xlu0 %873
      %875 = vadd.xlane.f32.xlu0 %v848
      %v876 = vpop.xlane.xlu0 %875
      %877 = vadd.xlane.f32.xlu0 %v849
      %v878 = vpop.xlane.xlu0 %877
      %879 = vadd.xlane.f32.xlu0 %v850
      %v880 = vpop.xlane.xlu0 %879
      %881 = vadd.xlane.f32.xlu0 %v851
      %v882 = vpop.xlane.xlu0 %881
      %883 = vadd.xlane.f32.xlu0 %v852
      %v884 = vpop.xlane.xlu0 %883
      %v885 = vmul.f32 %v854, 0.0078125
      %v886 = vmul.f32 %v856, 0.0078125
      %v887 = vmul.f32 %v858, 0.0078125
      %v888 = vmul.f32 %v860, 0.0078125
      %v889 = vmul.f32 %v862, 0.0078125
      %v890 = vmul.f32 %v864, 0.0078125
      %v891 = vmul.f32 %v866, 0.0078125
      %v892 = vmul.f32 %v868, 0.0078125
      %v893 = vmul.f32 %v870, 0.0078125
      %v894 = vmul.f32 %v872, 0.0078125
      %v895 = vmul.f32 %v874, 0.0078125
      %v896 = vmul.f32 %v876, 0.0078125
      %v897 = vmul.f32 %v878, 0.0078125
      %v898 = vmul.f32 %v880, 0.0078125
      %v899 = vmul.f32 %v882, 0.0078125
      %v900 = vmul.f32 %v884, 0.0078125
      %v901 = vadd.f32 %v885, 1e-06
      %v902 = vadd.f32 %v886, 1e-06
      %v903 = vadd.f32 %v887, 1e-06
      %v904 = vadd.f32 %v888, 1e-06
      %v905 = vadd.f32 %v889, 1e-06
      %v906 = vadd.f32 %v890, 1e-06
      %v907 = vadd.f32 %v891, 1e-06
      %v908 = vadd.f32 %v892, 1e-06
      %v909 = vadd.f32 %v893, 1e-06
      %v910 = vadd.f32 %v894, 1e-06
      %v911 = vadd.f32 %v895, 1e-06
      %v912 = vadd.f32 %v896, 1e-06
      %v913 = vadd.f32 %v897, 1e-06
      %v914 = vadd.f32 %v898, 1e-06
      %v915 = vadd.f32 %v899, 1e-06
      %v916 = vadd.f32 %v900, 1e-06
      %v917 = vrsqrt.pop %v901
      %v918 = vmul.f32 %v917, %v901
      %v919 = vmul.f32 %v918, %v917
      %v920 = vmul.f32 0.5, %v919
      %v921 = vsub.f32 1.5, %v920
      %v922 = vmul.f32 %v917, %v921
      %vm923 = vweird.f32 %v901
      %vm924 = vweird.f32 %v917
      %vm925 = vmor %vm923, %vm924
      %v926 = vsel %vm925, %v917, %v922
      %v927 = vrsqrt.pop %v902
      %v928 = vmul.f32 %v927, %v902
      %v929 = vmul.f32 %v928, %v927
      %v930 = vmul.f32 0.5, %v929
      %v931 = vsub.f32 1.5, %v930
      %v932 = vmul.f32 %v927, %v931
      %vm933 = vweird.f32 %v902
      %vm934 = vweird.f32 %v927
      %vm935 = vmor %vm933, %vm934
      %v936 = vsel %vm935, %v927, %v932
      %v937 = vrsqrt.pop %v903
      %v938 = vmul.f32 %v937, %v903
      %v939 = vmul.f32 %v938, %v937
      %v940 = vmul.f32 0.5, %v939
      %v941 = vsub.f32 1.5, %v940
      %v942 = vmul.f32 %v937, %v941
      %vm943 = vweird.f32 %v903
      %vm944 = vweird.f32 %v937
      %vm945 = vmor %vm943, %vm944
      %v946 = vsel %vm945, %v937, %v942
      %v947 = vrsqrt.pop %v904
      %v948 = vmul.f32 %v947, %v904
      %v949 = vmul.f32 %v948, %v947
      %v950 = vmul.f32 0.5, %v949
      %v951 = vsub.f32 1.5, %v950
      %v952 = vmul.f32 %v947, %v951
      %vm953 = vweird.f32 %v904
      %vm954 = vweird.f32 %v947
      %vm955 = vmor %vm953, %vm954
      %v956 = vsel %vm955, %v947, %v952
      %v957 = vrsqrt.pop %v905
      %v958 = vmul.f32 %v957, %v905
      %v959 = vmul.f32 %v958, %v957
      %v960 = vmul.f32 0.5, %v959
      %v961 = vsub.f32 1.5, %v960
      %v962 = vmul.f32 %v957, %v961
      %vm963 = vweird.f32 %v905
      %vm964 = vweird.f32 %v957
      %vm965 = vmor %vm963, %vm964
      %v966 = vsel %vm965, %v957, %v962
      %v967 = vrsqrt.pop %v906
      %v968 = vmul.f32 %v967, %v906
      %v969 = vmul.f32 %v968, %v967
      %v970 = vmul.f32 0.5, %v969
      %v971 = vsub.f32 1.5, %v970
      %v972 = vmul.f32 %v967, %v971
      %vm973 = vweird.f32 %v906
      %vm974 = vweird.f32 %v967
      %vm975 = vmor %vm973, %vm974
      %v976 = vsel %vm975, %v967, %v972
      %v977 = vrsqrt.pop %v907
      %v978 = vmul.f32 %v977, %v907
      %v979 = vmul.f32 %v978, %v977
      %v980 = vmul.f32 0.5, %v979
      %v981 = vsub.f32 1.5, %v980
      %v982 = vmul.f32 %v977, %v981
      %vm983 = vweird.f32 %v907
      %vm984 = vweird.f32 %v977
      %vm985 = vmor %vm983, %vm984
      %v986 = vsel %vm985, %v977, %v982
      %v987 = vrsqrt.pop %v908
      %v988 = vmul.f32 %v987, %v908
      %v989 = vmul.f32 %v988, %v987
      %v990 = vmul.f32 0.5, %v989
      %v991 = vsub.f32 1.5, %v990
      %v992 = vmul.f32 %v987, %v991
      %vm993 = vweird.f32 %v908
      %vm994 = vweird.f32 %v987
      %vm995 = vmor %vm993, %vm994
      %v996 = vsel %vm995, %v987, %v992
      %v997 = vrsqrt.pop %v909
      %v998 = vmul.f32 %v997, %v909
      %v999 = vmul.f32 %v998, %v997
      %v1000 = vmul.f32 0.5, %v999
      %v1001 = vsub.f32 1.5, %v1000
      %v1002 = vmul.f32 %v997, %v1001
      %vm1003 = vweird.f32 %v909
      %vm1004 = vweird.f32 %v997
      %vm1005 = vmor %vm1003, %vm1004
      %v1006 = vsel %vm1005, %v997, %v1002
      %v1007 = vrsqrt.pop %v910
      %v1008 = vmul.f32 %v1007, %v910
      %v1009 = vmul.f32 %v1008, %v1007
      %v1010 = vmul.f32 0.5, %v1009
      %v1011 = vsub.f32 1.5, %v1010
      %v1012 = vmul.f32 %v1007, %v1011
      %vm1013 = vweird.f32 %v910
      %vm1014 = vweird.f32 %v1007
      %vm1015 = vmor %vm1013, %vm1014
      %v1016 = vsel %vm1015, %v1007, %v1012
      %v1017 = vrsqrt.pop %v911
      %v1018 = vmul.f32 %v1017, %v911
      %v1019 = vmul.f32 %v1018, %v1017
      %v1020 = vmul.f32 0.5, %v1019
      %v1021 = vsub.f32 1.5, %v1020
      %v1022 = vmul.f32 %v1017, %v1021
      %vm1023 = vweird.f32 %v911
      %vm1024 = vweird.f32 %v1017
      %vm1025 = vmor %vm1023, %vm1024
      %v1026 = vsel %vm1025, %v1017, %v1022
      %v1027 = vrsqrt.pop %v912
      %v1028 = vmul.f32 %v1027, %v912
      %v1029 = vmul.f32 %v1028, %v1027
      %v1030 = vmul.f32 0.5, %v1029
      %v1031 = vsub.f32 1.5, %v1030
      %v1032 = vmul.f32 %v1027, %v1031
      %vm1033 = vweird.f32 %v912
      %vm1034 = vweird.f32 %v1027
      %vm1035 = vmor %vm1033, %vm1034
      %v1036 = vsel %vm1035, %v1027, %v1032
      %v1037 = vrsqrt.pop %v913
      %v1038 = vmul.f32 %v1037, %v913
      %v1039 = vmul.f32 %v1038, %v1037
      %v1040 = vmul.f32 0.5, %v1039
      %v1041 = vsub.f32 1.5, %v1040
      %v1042 = vmul.f32 %v1037, %v1041
      %vm1043 = vweird.f32 %v913
      %vm1044 = vweird.f32 %v1037
      %vm1045 = vmor %vm1043, %vm1044
      %v1046 = vsel %vm1045, %v1037, %v1042
      %v1047 = vrsqrt.pop %v914
      %v1048 = vmul.f32 %v1047, %v914
      %v1049 = vmul.f32 %v1048, %v1047
      %v1050 = vmul.f32 0.5, %v1049
      %v1051 = vsub.f32 1.5, %v1050
      %v1052 = vmul.f32 %v1047, %v1051
      %vm1053 = vweird.f32 %v914
      %vm1054 = vweird.f32 %v1047
      %vm1055 = vmor %vm1053, %vm1054
      %v1056 = vsel %vm1055, %v1047, %v1052
      %v1057 = vrsqrt.pop %v915
      %v1058 = vmul.f32 %v1057, %v915
      %v1059 = vmul.f32 %v1058, %v1057
      %v1060 = vmul.f32 0.5, %v1059
      %v1061 = vsub.f32 1.5, %v1060
      %v1062 = vmul.f32 %v1057, %v1061
      %vm1063 = vweird.f32 %v915
      %vm1064 = vweird.f32 %v1057
      %vm1065 = vmor %vm1063, %vm1064
      %v1066 = vsel %vm1065, %v1057, %v1062
      %v1067 = vrsqrt.pop %v916
      %v1068 = vmul.f32 %v1067, %v916
      %v1069 = vmul.f32 %v1068, %v1067
      %v1070 = vmul.f32 0.5, %v1069
      %v1071 = vsub.f32 1.5, %v1070
      %v1072 = vmul.f32 %v1067, %v1071
      %vm1073 = vweird.f32 %v916
      %vm1074 = vweird.f32 %v1067
      %vm1075 = vmor %vm1073, %vm1074
      %v1076 = vsel %vm1075, %v1067, %v1072
      %v1077 = vmul.f32 %v821, %v926
      %v1078 = vmul.f32 %v822, %v936
      %v1079 = vmul.f32 %v823, %v946
      %v1080 = vmul.f32 %v824, %v956
      %v1081 = vmul.f32 %v825, %v966
      %v1082 = vmul.f32 %v826, %v976
      %v1083 = vmul.f32 %v827, %v986
      %v1084 = vmul.f32 %v828, %v996
      %v1085 = vmul.f32 %v829, %v1006
      %v1086 = vmul.f32 %v830, %v1016
      %v1087 = vmul.f32 %v831, %v1026
      %v1088 = vmul.f32 %v832, %v1036
      %v1089 = vmul.f32 %v833, %v1046
      %v1090 = vmul.f32 %v834, %v1056
      %v1091 = vmul.f32 %v835, %v1066
      %v1092 = vmul.f32 %v836, %v1076
      %v1093 = vld [vmem:[%s5] sm:$0x1]
      %v1095 = vperm.slane %v1093, 0
      %v1097 = vmul.f32 %v1077, %v1095
      %v1098 = vmul.f32 %v1078, %v1095
      %v1099 = vmul.f32 %v1079, %v1095
      %v1100 = vmul.f32 %v1080, %v1095
      %v1101 = vmul.f32 %v1081, %v1095
      %v1102 = vmul.f32 %v1082, %v1095
      %v1103 = vmul.f32 %v1083, %v1095
      %v1104 = vmul.f32 %v1084, %v1095
      %v1105 = vmul.f32 %v1085, %v1095
      %v1106 = vmul.f32 %v1086, %v1095
      %v1107 = vmul.f32 %v1087, %v1095
      %v1108 = vmul.f32 %v1088, %v1095
      %v1109 = vmul.f32 %v1089, %v1095
      %v1110 = vmul.f32 %v1090, %v1095
      %v1111 = vmul.f32 %v1091, %v1095
      %v1112 = vmul.f32 %v1092, %v1095
      %v1113 = vld [vmem:[%s6] sm:$0x1]
      %v1115 = vperm.slane %v1113, 0
      %v1117 = vadd.f32 %v1097, %v1115
      %v1118 = vadd.f32 %v1098, %v1115
      %v1119 = vadd.f32 %v1099, %v1115
      %v1120 = vadd.f32 %v1100, %v1115
      %v1121 = vadd.f32 %v1101, %v1115
      %v1122 = vadd.f32 %v1102, %v1115
      %v1123 = vadd.f32 %v1103, %v1115
      %v1124 = vadd.f32 %v1104, %v1115
      %v1125 = vadd.f32 %v1105, %v1115
      %v1126 = vadd.f32 %v1106, %v1115
      %v1127 = vadd.f32 %v1107, %v1115
      %v1128 = vadd.f32 %v1108, %v1115
      %v1129 = vadd.f32 %v1109, %v1115
      %v1130 = vadd.f32 %v1110, %v1115
      %v1131 = vadd.f32 %v1111, %v1115
      %v1132 = vadd.f32 %v1112, %v1115
      %1133 = vst [vmem:[#allocation11] sm:$0xff] %v1117
      %1134 = vst [vmem:[#allocation11 + $0x8] sm:$0xff] %v1118
      %1135 = vst [vmem:[#allocation11 + $0x10] sm:$0xff] %v1119
      %1136 = vst [vmem:[#allocation11 + $0x18] sm:$0xff] %v1120
      %1137 = vst [vmem:[#allocation11 + $0x20] sm:$0xff] %v1121
      %1138 = vst [vmem:[#allocation11 + $0x28] sm:$0xff] %v1122
      %1139 = vst [vmem:[#allocation11 + $0x30] sm:$0xff] %v1123
      %1140 = vst [vmem:[#allocation11 + $0x38] sm:$0xff] %v1124
      %1141 = vst [vmem:[#allocation11 + $0x40] sm:$0xff] %v1125
      %1142 = vst [vmem:[#allocation11 + $0x48] sm:$0xff] %v1126
      %1143 = vst [vmem:[#allocation11 + $0x50] sm:$0xff] %v1127
      %1144 = vst [vmem:[#allocation11 + $0x58] sm:$0xff] %v1128
      %1145 = vst [vmem:[#allocation11 + $0x60] sm:$0xff] %v1129
      %1146 = vst [vmem:[#allocation11 + $0x68] sm:$0xff] %v1130
      %1147 = vst [vmem:[#allocation11 + $0x70] sm:$0xff] %v1131
      %1148 = vst [vmem:[#allocation11 + $0x78] sm:$0xff] %v1132
    $region53: #{tpu_custom_call.1} parent=1 // pred_fallthru
      _
    // Predicated region
    $region54: #{tpu_custom_call.1} parent=1 // pred_check
      _
    $region55: #{tpu_custom_call.1} parent=1 // pred_check_branch
      %1150 = sbr.rel (0) target = $region57
    $region56: #{tpu_custom_call.1} parent=1 // pred_region
      %1152 = vsyncadd [#allocation5], 0
      %s1153 = sshll.u32 [#allocation11], 4
      %s1154 = int_to_ptr.vmem [resolvable:$true] %s1153
      %s1155 = sshll.u32 %s7, 4
      %s1156 = int_to_ptr.hbm [resolvable:$true] %s1155
      %1161 = dma.vmem_to_hbm [thread:$0]  %s1154, 2048, %s1156, [#allocation5], 128, 128, 8
    $region57: #{tpu_custom_call.1} parent=1 // pred_fallthru
      _
    // Predicated region
    $region58: #{tpu_custom_call.1} parent=1 // pred_check
      _
    $region59: #{tpu_custom_call.1} parent=1 // pred_check_branch
      %1163 = sbr.rel (0) target = $region61
    $region60: #{tpu_custom_call.1} parent=1 // pred_region
      %1165 = dma.done [#allocation5], 2048
    $region61: #{tpu_custom_call.1} parent=1 // pred_fallthru
      _
    %1166 = vsyncpa [#allocation4], 1
    %1167 = vsyncpa [#allocation7], 1
    %1168 = vsyncpa [#allocation10], 1
    %1169 = vsyncpa [#allocation5], 1

</llo_original>
